<compile_context>
chip_gen: v7x
topology: tpu7x:2x2x1
jax: 0.10.0
libtpu: 0.0.40
codegen_flags: <defaults>
</compile_context>

<pallas_src>
import functools

import jax
import jax.numpy as jnp
from jax.experimental import pallas as pl
from jax.experimental.pallas import tpu as pltpu


def conv_stats_kernel(x_ref, w_ref, b_ref, y_ref, ps_ref, pss_ref,
                      *, k, pad, tile_rows, width):
    """3x3 conv (single folded MXU matmul) + bias for one (image, row-tile),
    plus per-image batch sum / sum-of-squares accumulated over the tile axis."""
    t = pl.program_id(1)                              # row tile (arbitrary axis)
    trw = tile_rows * width
    slab = x_ref[0, 0]                                # (Cin, slab_len_pad)

    # Column index of every output lane, used to mask the horizontal wrap of the
    # flattened tap windows at the left/right image edges (computed once per kx).
    col = jax.lax.broadcasted_iota(jnp.int32, (1, trw), 1) % width
    edge_mask = {}
    for kx in range(k):
        lo, hi = pad - kx, width + pad - kx
        if lo > 0 or hi < width:
            edge_mask[kx] = (col >= lo) & (col < hi)

    # Build the (K*K*Cin, TILE_ROWS*W) tap matrix with static lane slices only
    # (no in-kernel reshapes, no dynamic indexing).
    taps = []
    for ky in range(k):
        for kx in range(k):
            off = ky * width + kx
            win = slab[:, off:off + trw]              # (Cin, TRW), static slice
            if kx in edge_mask:
                win = jnp.where(edge_mask[kx], win, jnp.zeros_like(win))
            taps.append(win)
    b_mat = jnp.concatenate(taps, axis=0)             # (K*K*Cin, TRW)

    # Single folded MXU matmul, f32 accumulation, lane-dense result.
    acc = jnp.dot(w_ref[...], b_mat, preferred_element_type=jnp.float32)
    acc = acc + b_ref[...]                            # (Cout, TRW) + (Cout, 1)
    y_ref[0] = acc                                    # lane-dense store

    # Per-image BN statistics accumulated across the (arbitrary) tile axis.
    @pl.when(t == 0)
    def _():
        ps_ref[...] = jnp.zeros_like(ps_ref)
        pss_ref[...] = jnp.zeros_like(pss_ref)

    ps_ref[0] += jnp.sum(acc, axis=1, keepdims=True)         # (Cout, 1)
    pss_ref[0] += jnp.sum(acc * acc, axis=1, keepdims=True)  # (Cout, 1)


def bn_relu_kernel(y_ref, scale_ref, shift_ref, o_ref):
    """Fused per-channel affine normalization + ReLU (lane-dense, in place)."""
    o_ref[0] = jnp.maximum(y_ref[0] * scale_ref[...] + shift_ref[...], 0.0)


def _round_up(x, m):
    return -(-x // m) * m


def _pick_tile_rows(h, w, cin, cout, k, pad, in_bytes, budget=4 << 20):
    """Largest row-tile dividing H whose per-step VMEM footprint fits a
    conservative budget (safe for v7x's 64 MiB VMEM) and whose output block is
    lane-aligned."""
    cands = [tr for tr in range(1, h + 1)
             if h % tr == 0 and ((tr * w) % 128 == 0 or tr == h)]
    if cout % 8 != 0:            # partial-HW output blocks need Cout % 8 == 0
        cands = [h]
    cands.sort(reverse=True)
    for tr in cands:
        trw = tr * w
        slab_pad = _round_up((tr + 2 * pad) * w + 2 * pad, 128)
        need = (2 * cin * slab_pad * in_bytes        # slab, double-buffered
                + k * k * cin * trw * in_bytes       # in-kernel tap matrix
                + 4 * cout * trw * 4)                # acc + double-buffered y
        if need <= budget:
            return tr
    return min(cands)


def _pick_hw_tile(hw, cout, budget=8 << 20):
    """Largest lane-aligned HW tile for the elementwise BN+ReLU pass."""
    cands = [t for t in range(1, hw + 1)
             if hw % t == 0 and (t % 128 == 0 or t == hw)]
    if cout % 8 != 0:
        cands = [hw]
    cands.sort(reverse=True)
    for t in cands:
        if 4 * cout * t * 4 <= budget:               # in + out, double-buffered
            return t
    return min(cands)


def conv_block_forward(x_nchw, weight, bias, gamma, beta, *, eps=1e-5,
                       tile_rows=None, compute_dtype=jnp.float32):
    """Forward of ConvBlock. x_nchw: (N, Cin, H, W) float32. Returns NCHW f32."""
    N, Cin, H, W = x_nchw.shape
    Cout, Cin2, K, K2 = weight.shape
    assert Cin2 == Cin and K == K2 == 3, "ConvBlock uses a 3x3/stride-1/pad-1 conv"
    pad = (K - 1) // 2
    HW = H * W
    in_bytes = jnp.dtype(compute_dtype).itemsize

    if tile_rows is None:
        tile_rows = _pick_tile_rows(H, W, Cin, Cout, K, pad, in_bytes)
    assert H % tile_rows == 0
    assert (tile_rows * W) % 128 == 0 or tile_rows == H
    assert Cout % 8 == 0 or tile_rows == H
    n_tiles = H // tile_rows
    trw = tile_rows * W

    # ---- glue: one flat zero-pad of the NCHW input, then per-tile halo slabs.
    #      (No transposes, no im2col; the only duplication is the 2-row halo.)
    flat_pad = pad * W + pad
    slab_len_pad = _round_up((tile_rows + 2 * pad) * W + 2 * pad, 128)
    padded_len = (n_tiles - 1) * trw + slab_len_pad

    x_flat = x_nchw.reshape(N, Cin, HW).astype(compute_dtype)
    x_padded = jnp.pad(x_flat,
                       ((0, 0), (0, 0), (flat_pad, padded_len - HW - flat_pad)))
    x_slabs = jnp.stack(
        [jax.lax.slice_in_dim(x_padded, t * trw, t * trw + slab_len_pad, axis=2)
         for t in range(n_tiles)], axis=1)           # (N, n_tiles, Cin, slab_len_pad)
    # TODO(synk): for very large images a manual-DMA variant could stream slabs
    # straight from the unduplicated padded image instead of materializing the
    # (tiny) halo-duplicated slab stack in HBM.

    # Weights re-laid to the in-kernel tap-row order (ky, kx, cin).
    w_mat = jnp.transpose(weight, (0, 2, 3, 1)).reshape(Cout, K * K * Cin)
    w_mat = w_mat.astype(compute_dtype)
    b2 = bias.reshape(Cout, 1).astype(jnp.float32)

    kernel1 = functools.partial(conv_stats_kernel, k=K, pad=pad,
                                tile_rows=tile_rows, width=W)

    # ---- Pallas kernel 1: conv + bias + per-image batch-stat partial sums ----
    y, ps, pss = pl.pallas_call(
        kernel1,
        out_shape=(
            jax.ShapeDtypeStruct((N, Cout, HW), jnp.float32),
            jax.ShapeDtypeStruct((N, Cout, 1), jnp.float32),
            jax.ShapeDtypeStruct((N, Cout, 1), jnp.float32),
        ),
        grid_spec=pltpu.PrefetchScalarGridSpec(
            num_scalar_prefetch=0,
            grid=(N, n_tiles),
            in_specs=[
                pl.BlockSpec((1, 1, Cin, slab_len_pad), lambda n, t: (n, t, 0, 0)),
                pl.BlockSpec((Cout, K * K * Cin), lambda n, t: (0, 0)),
                pl.BlockSpec((Cout, 1), lambda n, t: (0, 0)),
            ],
            out_specs=[
                pl.BlockSpec((1, Cout, trw), lambda n, t: (n, 0, t)),
                pl.BlockSpec((1, Cout, 1), lambda n, t: (n, 0, 0)),
                pl.BlockSpec((1, Cout, 1), lambda n, t: (n, 0, 0)),
            ],
        ),
        compiler_params=pltpu.CompilerParams(
            dimension_semantics=("parallel", "arbitrary"),
            vmem_limit_bytes=32 * 1024 * 1024,
        ),
    )(x_slabs, w_mat, b2)

    # ---- tiny per-channel BatchNorm training statistics (f32, biased var) ----
    count = jnp.float32(N * HW)
    s = jnp.sum(ps[:, :, 0], axis=0)
    ss = jnp.sum(pss[:, :, 0], axis=0)
    mean = s / count
    var = jnp.maximum(ss / count - mean * mean, 0.0)   # clamp tiny negatives
    scale = gamma.astype(jnp.float32) / jnp.sqrt(var + eps)
    shift = beta.astype(jnp.float32) - mean * scale
    # TODO(synk): nn.BatchNorm2d also updates running_mean/running_var in place
    # during training; that module-state side effect is not part of the output.
    # TODO(synk): E[y^2]-E[y]^2 loses precision when |mean| >> std at very large
    # N*H*W; a two-pass / Welford accumulation would be more robust there.

    # ---- Pallas kernel 2: fused normalize + ReLU, aliased in place onto y ----
    hw_tile = _pick_hw_tile(HW, Cout)
    out = pl.pallas_call(
        bn_relu_kernel,
        out_shape=jax.ShapeDtypeStruct((N, Cout, HW), jnp.float32),
        grid_spec=pltpu.PrefetchScalarGridSpec(
            num_scalar_prefetch=0,
            grid=(N, HW // hw_tile),
            in_specs=[
                pl.BlockSpec((1, Cout, hw_tile), lambda n, t: (n, 0, t)),
                pl.BlockSpec((Cout, 1), lambda n, t: (0, 0)),
                pl.BlockSpec((Cout, 1), lambda n, t: (0, 0)),
            ],
            out_specs=pl.BlockSpec((1, Cout, hw_tile), lambda n, t: (n, 0, t)),
        ),
        input_output_aliases={0: 0},
        compiler_params=pltpu.CompilerParams(
            dimension_semantics=("parallel", "parallel"),
            vmem_limit_bytes=32 * 1024 * 1024,
        ),
    )(y, scale.reshape(Cout, 1), shift.reshape(Cout, 1))

    # Already channel-major: NCHW is a free reshape (no transpose pass).
    return out.reshape(N, Cout, H, W)


def _reference(x_nchw, weight, bias, gamma, beta, eps=1e-5):
    """Pure-JAX reference matching PyTorch ConvBlock.forward (training mode)."""
    p = (weight.shape[-1] - 1) // 2
    y = jax.lax.conv_general_dilated(
        x_nchw, weight, window_strides=(1, 1),
        padding=((p, p), (p, p)),
        dimension_numbers=("NCHW", "OIHW", "NCHW"),
    ) + bias[None, :, None, None]
    mean = y.mean(axis=(0, 2, 3), keepdims=True)
    var = y.var(axis=(0, 2, 3), keepdims=True)          # biased, like BN training
    yhat = (y - mean) / jnp.sqrt(var + eps)
    return jnp.maximum(yhat * gamma[None, :, None, None] + beta[None, :, None, None], 0.0)


if __name__ == "__main__":
    # Small shapes consistent with ConvBlock(in_ch=4, out_ch=8)
    N, Cin, Cout, H, W, K = 2, 4, 8, 16, 16, 3

    key = jax.random.PRNGKey(0)
    kx_, kw_, kb_ = jax.random.split(key, 3)
    x = jax.random.normal(kx_, (N, Cin, H, W), dtype=jnp.float32)
    weight = 0.1 * jax.random.normal(kw_, (Cout, Cin, K, K), dtype=jnp.float32)
    bias = 0.1 * jax.random.normal(kb_, (Cout,), dtype=jnp.float32)
    gamma = jnp.ones((Cout,), jnp.float32)   # BatchNorm2d default weight
    beta = jnp.zeros((Cout,), jnp.float32)   # BatchNorm2d default bias

    ref = _reference(x, weight, bias, gamma, beta)

    # f32 path, explicitly tiled (tile_rows=8 -> 2 row-tiles per image):
    # exercises halo slabs + per-image stat accumulation over the tile axis.
    fwd = jax.jit(functools.partial(conv_block_forward, tile_rows=8))
    out = jax.block_until_ready(fwd(x, weight, bias, gamma, beta))
    assert out.shape == (N, Cout, H, W), out.shape
    err = float(jnp.abs(out - ref).max())
    assert jnp.allclose(out, ref, atol=1e-3, rtol=1e-3), err

    # bf16 MXU-operand path with auto-picked tiling (whole image per step here);
    # f32 accumulation and f32 BN/statistics.
    fwd_bf16 = jax.jit(functools.partial(conv_block_forward,
                                         compute_dtype=jnp.bfloat16))
    out16 = jax.block_until_ready(fwd_bf16(x, weight, bias, gamma, beta))
    err16 = float(jnp.abs(out16 - ref).max())
    assert jnp.allclose(out16, ref, atol=5e-2, rtol=5e-2), err16

    print("KERNEL_OK")
</pallas_src>

<mosaic_0001>
module attributes {stable_mosaic.version = 11 : i64} {
  func.func @conv_stats_kernel(%arg0: i32, %arg1: i32, %arg2: memref<1x1x4x256xf32, #tpu.memory_space<vmem>>, %arg3: memref<8x36xf32, #tpu.memory_space<vmem>>, %arg4: memref<8x1xf32, #tpu.memory_space<vmem>>, %arg5: memref<1x8x128xf32, #tpu.memory_space<vmem>>, %arg6: memref<1x8x1xf32, #tpu.memory_space<vmem>>, %arg7: memref<1x8x1xf32, #tpu.memory_space<vmem>>) attributes {dimension_semantics = [#tpu.dimension_semantics<parallel>, #tpu.dimension_semantics<arbitrary>], iteration_bounds = array<i64: 2, 2>, scalar_prefetch = 0 : i64, scratch_operands = 0 : i64, tpu.core_type = #tpu.core_type<tc>, window_params = [{transform_indices = @transform_0, window_bounds = array<i64: 1, 1, 4, 256>}, {pipeline_mode = #tpu.pipeline_mode<synchronous>, transform_indices = @transform_1, window_bounds = array<i64: 8, 36>}, {pipeline_mode = #tpu.pipeline_mode<synchronous>, transform_indices = @transform_2, window_bounds = array<i64: 8, 1>}, {transform_indices = @transform_3, window_bounds = array<i64: 1, 8, 128>}, {transform_indices = @transform_4, window_bounds = array<i64: 1, 8, 1>}, {transform_indices = @transform_5, window_bounds = array<i64: 1, 8, 1>}]} {
    %c0 = arith.constant 0 : index
    %c0_0 = arith.constant 0 : index
    %c0_1 = arith.constant 0 : index
    %c0_2 = arith.constant 0 : index
    %0 = vector.load %arg2[%c0, %c0_0, %c0_1, %c0_2] : memref<1x1x4x256xf32, #tpu.memory_space<vmem>>, vector<1x1x4x256xf32>
    %1 = vector.shape_cast %0 : vector<1x1x4x256xf32> to vector<4x256xf32>
    %2 = tpu.iota {dimensions = array<i32: 1>} : vector<1x128xi32>
    %c16_i32 = arith.constant 16 : i32
    %c0_i32 = arith.constant 0 : i32
    %3 = arith.cmpi eq, %c16_i32, %c0_i32 : i32
    %c1_i32 = arith.constant 1 : i32
    %4 = arith.select %3, %c1_i32, %c16_i32 : i32
    %5 = vector.broadcast %4 : i32 to vector<1x128xi32>
    %6 = arith.remsi %2, %5 : vector<1x128xi32>
    %c0_i32_3 = arith.constant 0 : i32
    %7 = vector.broadcast %c0_i32_3 : i32 to vector<1x128xi32>
    %8 = arith.cmpi ne, %6, %7 : vector<1x128xi32>
    %c0_i32_4 = arith.constant 0 : i32
    %9 = vector.broadcast %c0_i32_4 : i32 to vector<1x128xi32>
    %10 = arith.cmpi slt, %6, %9 : vector<1x128xi32>
    %c0_i32_5 = arith.constant 0 : i32
    %11 = arith.cmpi slt, %4, %c0_i32_5 : i32
    %12 = vector.broadcast %11 : i1 to vector<1x128xi1>
    %13 = vector.broadcast %12 : vector<1x128xi1> to vector<1x128xi1>
    %14 = arith.xori %10, %13 : vector<1x128xi1>
    %15 = arith.andi %14, %8 : vector<1x128xi1>
    %16 = vector.broadcast %4 : i32 to vector<1x128xi32>
    %17 = arith.addi %6, %16 : vector<1x128xi32>
    %18 = arith.select %15, %17, %6 : vector<1x128xi1>, vector<1x128xi32>
    %c1_i32_6 = arith.constant 1 : i32
    %19 = vector.broadcast %c1_i32_6 : i32 to vector<1x128xi32>
    %20 = arith.cmpi sge, %18, %19 : vector<1x128xi32>
    %c17_i32 = arith.constant 17 : i32
    %21 = vector.broadcast %c17_i32 : i32 to vector<1x128xi32>
    %22 = arith.cmpi slt, %18, %21 : vector<1x128xi32>
    %23 = arith.andi %20, %22 : vector<1x128xi1>
    %c-1_i32 = arith.constant -1 : i32
    %24 = vector.broadcast %c-1_i32 : i32 to vector<1x128xi32>
    %25 = arith.cmpi sge, %18, %24 : vector<1x128xi32>
    %c15_i32 = arith.constant 15 : i32
    %26 = vector.broadcast %c15_i32 : i32 to vector<1x128xi32>
    %27 = arith.cmpi slt, %18, %26 : vector<1x128xi32>
    %28 = arith.andi %25, %27 : vector<1x128xi1>
    %29 = vector.extract_strided_slice %1 {offsets = [0, 0], sizes = [4, 128], strides = [1, 1]} : vector<4x256xf32> to vector<4x128xf32>
    %cst = arith.constant 0.000000e+00 : f32
    %30 = vector.broadcast %cst : f32 to vector<4x128xf32>
    %31 = vector.shape_cast %23 : vector<1x128xi1> to vector<1x128xi1>
    %32 = vector.broadcast %31 : vector<1x128xi1> to vector<4x128xi1>
    %33 = arith.select %32, %29, %30 : vector<4x128xi1>, vector<4x128xf32>
    %34 = vector.extract_strided_slice %1 {offsets = [0, 1], sizes = [4, 128], strides = [1, 1]} : vector<4x256xf32> to vector<4x128xf32>
    %35 = vector.extract_strided_slice %1 {offsets = [0, 2], sizes = [4, 128], strides = [1, 1]} : vector<4x256xf32> to vector<4x128xf32>
    %cst_7 = arith.constant 0.000000e+00 : f32
    %36 = vector.broadcast %cst_7 : f32 to vector<4x128xf32>
    %37 = vector.shape_cast %28 : vector<1x128xi1> to vector<1x128xi1>
    %38 = vector.broadcast %37 : vector<1x128xi1> to vector<4x128xi1>
    %39 = arith.select %38, %35, %36 : vector<4x128xi1>, vector<4x128xf32>
    %40 = vector.extract_strided_slice %1 {offsets = [0, 16], sizes = [4, 128], strides = [1, 1]} : vector<4x256xf32> to vector<4x128xf32>
    %cst_8 = arith.constant 0.000000e+00 : f32
    %41 = vector.broadcast %cst_8 : f32 to vector<4x128xf32>
    %42 = vector.shape_cast %23 : vector<1x128xi1> to vector<1x128xi1>
    %43 = vector.broadcast %42 : vector<1x128xi1> to vector<4x128xi1>
    %44 = arith.select %43, %40, %41 : vector<4x128xi1>, vector<4x128xf32>
    %45 = vector.extract_strided_slice %1 {offsets = [0, 17], sizes = [4, 128], strides = [1, 1]} : vector<4x256xf32> to vector<4x128xf32>
    %46 = vector.extract_strided_slice %1 {offsets = [0, 18], sizes = [4, 128], strides = [1, 1]} : vector<4x256xf32> to vector<4x128xf32>
    %cst_9 = arith.constant 0.000000e+00 : f32
    %47 = vector.broadcast %cst_9 : f32 to vector<4x128xf32>
    %48 = vector.shape_cast %28 : vector<1x128xi1> to vector<1x128xi1>
    %49 = vector.broadcast %48 : vector<1x128xi1> to vector<4x128xi1>
    %50 = arith.select %49, %46, %47 : vector<4x128xi1>, vector<4x128xf32>
    %51 = vector.extract_strided_slice %1 {offsets = [0, 32], sizes = [4, 128], strides = [1, 1]} : vector<4x256xf32> to vector<4x128xf32>
    %cst_10 = arith.constant 0.000000e+00 : f32
    %52 = vector.broadcast %cst_10 : f32 to vector<4x128xf32>
    %53 = vector.shape_cast %23 : vector<1x128xi1> to vector<1x128xi1>
    %54 = vector.broadcast %53 : vector<1x128xi1> to vector<4x128xi1>
    %55 = arith.select %54, %51, %52 : vector<4x128xi1>, vector<4x128xf32>
    %56 = vector.extract_strided_slice %1 {offsets = [0, 33], sizes = [4, 128], strides = [1, 1]} : vector<4x256xf32> to vector<4x128xf32>
    %57 = vector.extract_strided_slice %1 {offsets = [0, 34], sizes = [4, 128], strides = [1, 1]} : vector<4x256xf32> to vector<4x128xf32>
    %cst_11 = arith.constant 0.000000e+00 : f32
    %58 = vector.broadcast %cst_11 : f32 to vector<4x128xf32>
    %59 = vector.shape_cast %28 : vector<1x128xi1> to vector<1x128xi1>
    %60 = vector.broadcast %59 : vector<1x128xi1> to vector<4x128xi1>
    %61 = arith.select %60, %57, %58 : vector<4x128xi1>, vector<4x128xf32>
    %62 = tpu.concatenate %33, %34, %39, %44, %45, %50, %55, %56, %61 in 0 : vector<4x128xf32>, vector<4x128xf32>, vector<4x128xf32>, vector<4x128xf32>, vector<4x128xf32>, vector<4x128xf32>, vector<4x128xf32>, vector<4x128xf32>, vector<4x128xf32> -> vector<36x128xf32>
    %c0_12 = arith.constant 0 : index
    %c0_13 = arith.constant 0 : index
    %63 = vector.load %arg3[%c0_12, %c0_13] : memref<8x36xf32, #tpu.memory_space<vmem>>, vector<8x36xf32>
    %cst_14 = arith.constant dense<0.000000e+00> : vector<8x128xf32>
    %64 = tpu.matmul %63, %62, %cst_14 {dimension_numbers = #tpu.dot_dimension_numbers<[1], [0], [0], [1], [0, 0, 1, 1], [], []>} : vector<8x36xf32>, vector<36x128xf32>, vector<8x128xf32> -> vector<8x128xf32>
    %c0_15 = arith.constant 0 : index
    %c0_16 = arith.constant 0 : index
    %65 = vector.load %arg4[%c0_15, %c0_16] : memref<8x1xf32, #tpu.memory_space<vmem>>, vector<8x1xf32>
    %66 = vector.broadcast %65 : vector<8x1xf32> to vector<8x128xf32>
    %67 = arith.addf %64, %66 : vector<8x128xf32>
    %c0_17 = arith.constant 0 : index
    %c0_18 = arith.constant 0 : index
    %c0_19 = arith.constant 0 : index
    %68 = vector.load %arg5[%c0_17, %c0_18, %c0_19] : memref<1x8x128xf32, #tpu.memory_space<vmem>>, vector<1x8x128xf32>
    %69 = vector.shape_cast %68 : vector<1x8x128xf32> to vector<8x128xf32>
    %70 = vector.shape_cast %67 : vector<8x128xf32> to vector<1x8x128xf32>
    tpu.vector_store %arg5[%c0_17, %c0_18, %c0_19], %70 {strides = array<i32>} : memref<1x8x128xf32, #tpu.memory_space<vmem>>, vector<1x8x128xf32>,
    %c0_i32_20 = arith.constant 0 : i32
    %71 = arith.cmpi eq, %arg1, %c0_i32_20 : i32
    %72 = arith.extui %71 : i1 to i32
    %c0_i32_21 = arith.constant 0 : i32
    %73 = arith.cmpi ne, %72, %c0_i32_21 : i32
    scf.if %73 {
      %cst_36 = arith.constant 0.000000e+00 : f32
      %91 = vector.broadcast %cst_36 : f32 to vector<1x8x1xf32>
      %c0_37 = arith.constant 0 : index
      %c0_38 = arith.constant 0 : index
      %c0_39 = arith.constant 0 : index
      %92 = vector.load %arg6[%c0_37, %c0_38, %c0_39] : memref<1x8x1xf32, #tpu.memory_space<vmem>>, vector<1x8x1xf32>
      tpu.vector_store %arg6[%c0_37, %c0_38, %c0_39], %91 {strides = array<i32>} : memref<1x8x1xf32, #tpu.memory_space<vmem>>, vector<1x8x1xf32>,
      %cst_40 = arith.constant 0.000000e+00 : f32
      %93 = vector.broadcast %cst_40 : f32 to vector<1x8x1xf32>
      %c0_41 = arith.constant 0 : index
      %c0_42 = arith.constant 0 : index
      %c0_43 = arith.constant 0 : index
      %94 = vector.load %arg7[%c0_41, %c0_42, %c0_43] : memref<1x8x1xf32, #tpu.memory_space<vmem>>, vector<1x8x1xf32>
      tpu.vector_store %arg7[%c0_41, %c0_42, %c0_43], %93 {strides = array<i32>} : memref<1x8x1xf32, #tpu.memory_space<vmem>>, vector<1x8x1xf32>,
    } else {
    }
    %c0_22 = arith.constant 0 : index
    %c0_23 = arith.constant 0 : index
    %c0_24 = arith.constant 0 : index
    %74 = vector.load %arg6[%c0_22, %c0_23, %c0_24] : memref<1x8x1xf32, #tpu.memory_space<vmem>>, vector<1x8x1xf32>
    %75 = vector.shape_cast %74 : vector<1x8x1xf32> to vector<8x1xf32>
    %cst_25 = arith.constant dense<0.000000e+00> : vector<8xf32>
    %76 = vector.multi_reduction <add>, %67, %cst_25 [1] : vector<8x128xf32> to vector<8xf32>
    %77 = vector.shape_cast %76 : vector<8xf32> to vector<8x1xf32>
    %78 = arith.addf %75, %77 : vector<8x1xf32>
    %c0_26 = arith.constant 0 : index
    %c0_27 = arith.constant 0 : index
    %c0_28 = arith.constant 0 : index
    %79 = vector.load %arg6[%c0_26, %c0_27, %c0_28] : memref<1x8x1xf32, #tpu.memory_space<vmem>>, vector<1x8x1xf32>
    %80 = vector.shape_cast %79 : vector<1x8x1xf32> to vector<8x1xf32>
    %81 = vector.shape_cast %78 : vector<8x1xf32> to vector<1x8x1xf32>
    tpu.vector_store %arg6[%c0_26, %c0_27, %c0_28], %81 {strides = array<i32>} : memref<1x8x1xf32, #tpu.memory_space<vmem>>, vector<1x8x1xf32>,
    %c0_29 = arith.constant 0 : index
    %c0_30 = arith.constant 0 : index
    %c0_31 = arith.constant 0 : index
    %82 = vector.load %arg7[%c0_29, %c0_30, %c0_31] : memref<1x8x1xf32, #tpu.memory_space<vmem>>, vector<1x8x1xf32>
    %83 = vector.shape_cast %82 : vector<1x8x1xf32> to vector<8x1xf32>
    %84 = arith.mulf %67, %67 : vector<8x128xf32>
    %cst_32 = arith.constant dense<0.000000e+00> : vector<8xf32>
    %85 = vector.multi_reduction <add>, %84, %cst_32 [1] : vector<8x128xf32> to vector<8xf32>
    %86 = vector.shape_cast %85 : vector<8xf32> to vector<8x1xf32>
    %87 = arith.addf %83, %86 : vector<8x1xf32>
    %c0_33 = arith.constant 0 : index
    %c0_34 = arith.constant 0 : index
    %c0_35 = arith.constant 0 : index
    %88 = vector.load %arg7[%c0_33, %c0_34, %c0_35] : memref<1x8x1xf32, #tpu.memory_space<vmem>>, vector<1x8x1xf32>
    %89 = vector.shape_cast %88 : vector<1x8x1xf32> to vector<8x1xf32>
    %90 = vector.shape_cast %87 : vector<8x1xf32> to vector<1x8x1xf32>
    tpu.vector_store %arg7[%c0_33, %c0_34, %c0_35], %90 {strides = array<i32>} : memref<1x8x1xf32, #tpu.memory_space<vmem>>, vector<1x8x1xf32>,
    return
  }
  func.func @transform_0(%arg0: i32, %arg1: i32) -> (i32, i32, i32, i32) {
    %c0_i32 = arith.constant 0 : i32
    %c0_i32_0 = arith.constant 0 : i32
    %c0_i32_1 = arith.constant 0 : i32
    return %arg0, %arg1, %c0_i32, %c0_i32_0 : i32, i32, i32, i32
  }
  func.func @transform_1(%arg0: i32, %arg1: i32) -> (i32, i32) {
    %c0_i32 = arith.constant 0 : i32
    %c0_i32_0 = arith.constant 0 : i32
    %c0_i32_1 = arith.constant 0 : i32
    return %c0_i32, %c0_i32_0 : i32, i32
  }
  func.func @transform_2(%arg0: i32, %arg1: i32) -> (i32, i32) {
    %c0_i32 = arith.constant 0 : i32
    %c0_i32_0 = arith.constant 0 : i32
    %c0_i32_1 = arith.constant 0 : i32
    return %c0_i32, %c0_i32_0 : i32, i32
  }
  func.func @transform_3(%arg0: i32, %arg1: i32) -> (i32, i32, i32) {
    %c0_i32 = arith.constant 0 : i32
    %c0_i32_0 = arith.constant 0 : i32
    return %arg0, %c0_i32, %arg1 : i32, i32, i32
  }
  func.func @transform_4(%arg0: i32, %arg1: i32) -> (i32, i32, i32) {
    %c0_i32 = arith.constant 0 : i32
    %c0_i32_0 = arith.constant 0 : i32
    %c0_i32_1 = arith.constant 0 : i32
    return %arg0, %c0_i32, %c0_i32_0 : i32, i32, i32
  }
  func.func @transform_5(%arg0: i32, %arg1: i32) -> (i32, i32, i32) {
    %c0_i32 = arith.constant 0 : i32
    %c0_i32_0 = arith.constant 0 : i32
    %c0_i32_1 = arith.constant 0 : i32
    return %arg0, %c0_i32, %c0_i32_0 : i32, i32, i32
  }
}

module attributes {stable_mosaic.version = 11 : i64} {
  func.func @bn_relu_kernel(%arg0: i32, %arg1: i32, %arg2: memref<1x8x256xf32, #tpu.memory_space<vmem>>, %arg3: memref<8x1xf32, #tpu.memory_space<vmem>>, %arg4: memref<8x1xf32, #tpu.memory_space<vmem>>, %arg5: memref<1x8x256xf32, #tpu.memory_space<vmem>>) attributes {dimension_semantics = [#tpu.dimension_semantics<parallel>, #tpu.dimension_semantics<parallel>], iteration_bounds = array<i64: 2, 1>, scalar_prefetch = 0 : i64, scratch_operands = 0 : i64, tpu.core_type = #tpu.core_type<tc>, window_params = [{transform_indices = @transform_0, window_bounds = array<i64: 1, 8, 256>}, {pipeline_mode = #tpu.pipeline_mode<synchronous>, transform_indices = @transform_1, window_bounds = array<i64: 8, 1>}, {pipeline_mode = #tpu.pipeline_mode<synchronous>, transform_indices = @transform_2, window_bounds = array<i64: 8, 1>}, {transform_indices = @transform_3, window_bounds = array<i64: 1, 8, 256>}]} {
    %c0 = arith.constant 0 : index
    %c0_0 = arith.constant 0 : index
    %c0_1 = arith.constant 0 : index
    %0 = vector.load %arg2[%c0, %c0_0, %c0_1] : memref<1x8x256xf32, #tpu.memory_space<vmem>>, vector<1x8x256xf32>
    %1 = vector.shape_cast %0 : vector<1x8x256xf32> to vector<8x256xf32>
    %c0_2 = arith.constant 0 : index
    %c0_3 = arith.constant 0 : index
    %2 = vector.load %arg3[%c0_2, %c0_3] : memref<8x1xf32, #tpu.memory_space<vmem>>, vector<8x1xf32>
    %3 = vector.broadcast %2 : vector<8x1xf32> to vector<8x256xf32>
    %4 = arith.mulf %1, %3 : vector<8x256xf32>
    %c0_4 = arith.constant 0 : index
    %c0_5 = arith.constant 0 : index
    %5 = vector.load %arg4[%c0_4, %c0_5] : memref<8x1xf32, #tpu.memory_space<vmem>>, vector<8x1xf32>
    %6 = vector.broadcast %5 : vector<8x1xf32> to vector<8x256xf32>
    %7 = arith.addf %4, %6 : vector<8x256xf32>
    %cst = arith.constant 0.000000e+00 : f32
    %8 = vector.broadcast %cst : f32 to vector<8x256xf32>
    %9 = arith.maximumf %7, %8 : vector<8x256xf32>
    %c0_6 = arith.constant 0 : index
    %c0_7 = arith.constant 0 : index
    %c0_8 = arith.constant 0 : index
    %10 = vector.load %arg5[%c0_6, %c0_7, %c0_8] : memref<1x8x256xf32, #tpu.memory_space<vmem>>, vector<1x8x256xf32>
    %11 = vector.shape_cast %10 : vector<1x8x256xf32> to vector<8x256xf32>
    %12 = vector.shape_cast %9 : vector<8x256xf32> to vector<1x8x256xf32>
    tpu.vector_store %arg5[%c0_6, %c0_7, %c0_8], %12 {strides = array<i32>} : memref<1x8x256xf32, #tpu.memory_space<vmem>>, vector<1x8x256xf32>,
    return
  }
  func.func @transform_0(%arg0: i32, %arg1: i32) -> (i32, i32, i32) {
    %c0_i32 = arith.constant 0 : i32
    %c0_i32_0 = arith.constant 0 : i32
    return %arg0, %c0_i32, %arg1 : i32, i32, i32
  }
  func.func @transform_1(%arg0: i32, %arg1: i32) -> (i32, i32) {
    %c0_i32 = arith.constant 0 : i32
    %c0_i32_0 = arith.constant 0 : i32
    %c0_i32_1 = arith.constant 0 : i32
    return %c0_i32, %c0_i32_0 : i32, i32
  }
  func.func @transform_2(%arg0: i32, %arg1: i32) -> (i32, i32) {
    %c0_i32 = arith.constant 0 : i32
    %c0_i32_0 = arith.constant 0 : i32
    %c0_i32_1 = arith.constant 0 : i32
    return %c0_i32, %c0_i32_0 : i32, i32
  }
  func.func @transform_3(%arg0: i32, %arg1: i32) -> (i32, i32, i32) {
    %c0_i32 = arith.constant 0 : i32
    %c0_i32_0 = arith.constant 0 : i32
    return %arg0, %c0_i32, %arg1 : i32, i32, i32
  }
}

</mosaic_0001>

<llo_original>
// kernel: conv_block_forward.3
$region0: #{conv_block_forward.3}
  #allocation0 [shape = 'u32[]', space=smem, size = 0x4, offset = 0x4, fixed_abs, tag = 'smem constant byte address 0x4 - core index']
  #allocation1 [shape = 'u32[144,128]{1,0:T(1,128)}', space=vmem, size = 0x12000, scoped, tag = 'internal scratch']
  %s0 = inlined_call_operand.vmem [shape: f32[2,8,256], index: 0, kind: input, shape index: {}, may-alias: {0,3}]
  %s1 = inlined_call_operand.vmem [shape: f32[8,1], index: 1, kind: input, shape index: {}]
  %s2 = inlined_call_operand.vmem [shape: f32[8,1], index: 2, kind: input, shape index: {}]
  %s3 = inlined_call_operand.vmem [shape: f32[2,8,256], index: 3, kind: output, shape index: {}, may-alias: {0,3}]
  %s4 = sld [smem:[#allocation0]]
  $region45: #{conv_block_forward.3} parent=0
    _
  %s6 = ssub.s32 1, %s4
  %s7 = scalar_select 0, %s6, %s4
  loop: start=0, step=1, limit=4
  $region2: #{conv_block_forward.3} parent=0 // loop_pre_header
    _
  $region3: #{conv_block_forward.3} parent=0 // loop_header
    %s9 = sphi 0, %s13
    %p10 = scmp.ge.s32.totalorder %s9, 4
    %s16 = sphi 0, %s28
    %s17 = sphi 0, %s24
    %s18 = sphi 0, %s16
    %s19 = sphi 0, %s17
    %s20 = sphi 0, %s18
    %s21 = sphi 0, %s19
    %s33 = sphi 0, %s35
    %s36 = sphi 0, %s33
    %s37 = sphi 0, %s36
    %s53 = sphi 0, %s37
    %s57 = sphi 0, %s57
    %s59 = sphi 0, %s57
    %s60 = sphi 0, %s59
    %s74 = sphi 0, %s60
    %s78 = sphi 0, %s78
    %s80 = sphi 0, %s78
    %s81 = sphi 0, %s80
    %s95 = sphi 0, %s81
    %s103 = sphi 0, %s105
    %s106 = sphi 0, %s103
    %s107 = sphi 0, %s106
    %s123 = sphi 0, %s107
  $region4: #{conv_block_forward.3} parent=0 // loop_header_branch
    %12 = sbr.rel (%p10) target = $region8
  $region5: #{conv_block_forward.3} parent=0 // loop_body
    %s14 = ssub.s32 %s9, 1
    %s15 = ssub.s32 %s9, 2
    %s22 = sadd.s32 1, %s17
    %p23 = scmp.ge.s32.totalorder %s22, 1
    %s24 = scalar_select %p23, 0, %s22
    %s25 = sadd.s32 1, %s16
    %s26 = scalar_select %p23, %s25, %s16
    %p27 = scmp.ge.s32.totalorder %s26, 2
    %s28 = scalar_select %p27, 0, %s26
    %s29 = ssub.s32 %s16, %s28
    %s30 = ssub.s32 %s17, %s24
    %s31 = sor.u32 %s29, %s30
    %p32 = scmp.eq.s32.totalorder %s31, 0
    %s34 = sadd.s32 %s33, 1
    %s35 = scalar_select %p32, %s33, %s34
    %p38 = pneg %p32
    %p39 = scmp.eq.s32.totalorder %s9, 1
    %p40 = por %p38, %p39
    %p41 = scmp.ne.s32.totalorder %s33, %s36
    %p42 = scmp.eq.s32.totalorder %s9, 0
    %p43 = por %p41, %p42
    %p44 = scmp.ne.s32.totalorder %s33, %s36
    %p45 = scmp.eq.s32.totalorder %s14, 1
    %p46 = por %p44, %p45
    %p47 = scmp.ne.s32.totalorder %s36, %s37
    %p48 = scmp.eq.s32.totalorder %s14, 0
    %p49 = por %p47, %p48
    %p50 = scmp.ne.s32.totalorder %s36, %s37
    %p51 = scmp.eq.s32.totalorder %s15, 1
    %p52 = por %p50, %p51
    %p54 = scmp.ne.s32.totalorder %s37, %s53
    %p55 = scmp.eq.s32.totalorder %s15, 0
    %p56 = por %p54, %p55
    %s58 = sadd.s32 %s57, 1
    %p61 = scmp.eq.s32.totalorder %s9, 1
    %p62 = scmp.ne.s32.totalorder %s57, %s59
    %p63 = scmp.eq.s32.totalorder %s9, 0
    %p64 = por %p62, %p63
    %p65 = scmp.ne.s32.totalorder %s57, %s59
    %p66 = scmp.eq.s32.totalorder %s14, 1
    %p67 = por %p65, %p66
    %p68 = scmp.ne.s32.totalorder %s59, %s60
    %p69 = scmp.eq.s32.totalorder %s14, 0
    %p70 = por %p68, %p69
    %p71 = scmp.ne.s32.totalorder %s59, %s60
    %p72 = scmp.eq.s32.totalorder %s15, 1
    %p73 = por %p71, %p72
    %p75 = scmp.ne.s32.totalorder %s60, %s74
    %p76 = scmp.eq.s32.totalorder %s15, 0
    %p77 = por %p75, %p76
    %s79 = sadd.s32 %s78, 1
    %p82 = scmp.eq.s32.totalorder %s9, 1
    %p83 = scmp.ne.s32.totalorder %s78, %s80
    %p84 = scmp.eq.s32.totalorder %s9, 0
    %p85 = por %p83, %p84
    %p86 = scmp.ne.s32.totalorder %s78, %s80
    %p87 = scmp.eq.s32.totalorder %s14, 1
    %p88 = por %p86, %p87
    %p89 = scmp.ne.s32.totalorder %s80, %s81
    %p90 = scmp.eq.s32.totalorder %s14, 0
    %p91 = por %p89, %p90
    %p92 = scmp.ne.s32.totalorder %s80, %s81
    %p93 = scmp.eq.s32.totalorder %s15, 1
    %p94 = por %p92, %p93
    %p96 = scmp.ne.s32.totalorder %s81, %s95
    %p97 = scmp.eq.s32.totalorder %s15, 0
    %p98 = por %p96, %p97
    %s99 = ssub.s32 %s16, %s28
    %s100 = ssub.s32 %s17, %s24
    %s101 = sor.u32 %s99, %s100
    %p102 = scmp.eq.s32.totalorder %s101, 0
    %s104 = sadd.s32 %s103, 1
    %s105 = scalar_select %p102, %s103, %s104
    %p108 = pneg %p102
    %p109 = scmp.eq.s32.totalorder %s9, 1
    %p110 = por %p108, %p109
    %p111 = scmp.ne.s32.totalorder %s103, %s106
    %p112 = scmp.eq.s32.totalorder %s9, 0
    %p113 = por %p111, %p112
    %p114 = scmp.ne.s32.totalorder %s103, %s106
    %p115 = scmp.eq.s32.totalorder %s14, 1
    %p116 = por %p114, %p115
    %p117 = scmp.ne.s32.totalorder %s106, %s107
    %p118 = scmp.eq.s32.totalorder %s14, 0
    %p119 = por %p117, %p118
    %p120 = scmp.ne.s32.totalorder %s106, %s107
    %p121 = scmp.eq.s32.totalorder %s15, 1
    %p122 = por %p120, %p121
    %p124 = scmp.ne.s32.totalorder %s107, %s123
    %p125 = scmp.eq.s32.totalorder %s15, 0
    %p126 = por %p124, %p125
    %p127 = scmp.le.s32.totalorder 1, %s9
    %p128 = scmp.lt.s32.totalorder %s9, 3
    %p129 = pnand %p127, %p128
    %p130 = pneg %p129
    // Predicated region
    $region9: #{conv_block_forward.3} parent=5 // pred_check
      _
    $region10: #{conv_block_forward.3} parent=5 // pred_check_branch
      %132 = sbr.rel (%p129) target = $region12
    $region11: #{conv_block_forward.3} parent=5 // pred_region
      %s133 = ssub.s32 %s9, 1
      // Predicated region
      $region13: #{conv_block_forward.3} parent=11 // pred_check
        %p134 = pneg %p70
      $region14: #{conv_block_forward.3} parent=11 // pred_check_branch
        %136 = sbr.rel (%p134) target = $region16
      $region15: #{conv_block_forward.3} parent=11 // pred_region
        _
      $region16: #{conv_block_forward.3} parent=11 // pred_fallthru
        _
      // Predicated region
      $region17: #{conv_block_forward.3} parent=11 // pred_check
        %p137 = pneg %p91
      $region18: #{conv_block_forward.3} parent=11 // pred_check_branch
        %139 = sbr.rel (%p137) target = $region20
      $region19: #{conv_block_forward.3} parent=11 // pred_region
        _
      $region20: #{conv_block_forward.3} parent=11 // pred_fallthru
        _
    $region12: #{conv_block_forward.3} parent=5 // pred_fallthru
      _
    %p140 = scmp.lt.s32.totalorder %s9, 2
    // Predicated region
    $region21: #{conv_block_forward.3} parent=5 // pred_check
      %p141 = pneg %p140
    $region22: #{conv_block_forward.3} parent=5 // pred_check_branch
      %143 = sbr.rel (%p141) target = $region24
    $region23: #{conv_block_forward.3} parent=5 // pred_region
      // Predicated region
      $region25: #{conv_block_forward.3} parent=23 // pred_check
        %p144 = pneg %p43
      $region26: #{conv_block_forward.3} parent=23 // pred_check_branch
        %146 = sbr.rel (%p144) target = $region28
      $region27: #{conv_block_forward.3} parent=23 // pred_region
        %s147 = smul.u32 2, %s17
        %p148 = scmp.lt.s32.totalorder %s16, 1
        %s149 = scalar_select %p148, %s16, 1
        %p150 = scmp.lt.s32.totalorder %s147, 1
        %s151 = scalar_select %p150, %s147, 1
        %s152 = smul.addr %s149, 2
        %s153 = sadd.s32 %s151, %s152
        %s154 = smul.addr %s153, 8
        %s155 = scalar_lea.vmem %s0, %s154
        %s156 = smul.u32 2, %s17
      $region28: #{conv_block_forward.3} parent=23 // pred_fallthru
        _
    $region24: #{conv_block_forward.3} parent=5 // pred_fallthru
      _
    %p157 = scmp.le.s32.totalorder 1, %s9
    %p158 = scmp.lt.s32.totalorder %s9, 3
    %p159 = pnand %p157, %p158
    %p160 = pneg %p159
    // Predicated region
    $region29: #{conv_block_forward.3} parent=5 // pred_check
      _
    $region30: #{conv_block_forward.3} parent=5 // pred_check_branch
      %162 = sbr.rel (%p159) target = $region32
    $region31: #{conv_block_forward.3} parent=5 // pred_region
      %s163 = ssub.s32 %s9, 1
      %s164 = smul.u32 2, %s19
      %p165 = scmp.lt.s32.totalorder %s18, 1
      %s166 = scalar_select %p165, %s18, 1
      %p167 = scmp.lt.s32.totalorder %s164, 1
      %s168 = scalar_select %p167, %s164, 1
      %s169 = smul.addr %s166, 2
      %s170 = sadd.s32 %s168, %s169
      %s171 = smul.addr %s170, 8
      %s172 = scalar_lea.vmem %s0, %s171
      %p173 = pneg %p49
      %p174 = pneg %p46
      %p175 = pneg %p70
      %p176 = pneg %p67
      %p177 = pneg %p91
      %p178 = pneg %p88
      %p179 = pneg %p119
      %p180 = pneg %p116
      %s181 = smul.u32 2, %s19
      %p182 = scmp.lt.s32.totalorder %s18, 1
      %s183 = scalar_select %p182, %s18, 1
      %p184 = scmp.lt.s32.totalorder %s181, 1
      %s185 = scalar_select %p184, %s181, 1
      %s186 = smul.addr %s183, 2
      %s187 = sadd.s32 %s185, %s186
      %s188 = smul.addr %s187, 8
      %s189 = scalar_lea.vmem %s3, %s188
      %s190 = smul.u32 2, %s19
      %p191 = scmp.lt.s32.totalorder %s18, 1
      %s192 = scalar_select %p191, %s18, 1
      %p193 = scmp.lt.s32.totalorder %s190, 1
      %s194 = scalar_select %p193, %s190, 1
      %s195 = smul.addr %s192, 2
      %s196 = sadd.s32 %s194, %s195
      %s197 = smul.addr %s196, 8
      %s198 = scalar_lea.vmem %s0, %s197
      %s199 = smul.u32 2, %s19
      %s200 = smul.u32 2, %s19
      %p201 = scmp.lt.s32.totalorder %s18, 1
      %s202 = scalar_select %p201, %s18, 1
      %p203 = scmp.lt.s32.totalorder %s200, 1
      %s204 = scalar_select %p203, %s200, 1
      %s205 = smul.addr %s202, 2
      %s206 = sadd.s32 %s204, %s205
      %s207 = smul.addr %s206, 8
      %s208 = scalar_lea.vmem %s3, %s207
      %s209 = smul.u32 2, %s19
      %v210 = vld [vmem:[%s198] sm:$0xff]
      %v211 = vld [vmem:[%s198 + $0x8] sm:$0xff]
      %v212 = vld [vmem:[%s1] sm:$0xff]
      %214 = vset.pattern.permute.xlu0 0
      %215 = vperm.xlu0 %214, %v212
      %v216 = vpop.permute.xlu0 %215
      %v218 = vmul.f32 %v210, %v216
      %v219 = vmul.f32 %v211, %v216
      %v220 = vld [vmem:[%s2] sm:$0xff]
      %222 = vset.pattern.permute.xlu0 0
      %223 = vperm.xlu0 %222, %v220
      %v224 = vpop.permute.xlu0 %223
      %v226 = vadd.f32 %v218, %v224
      %v227 = vadd.f32 %v219, %v224
      %v228 = vmax.f32 %v226, 0.0
      %v229 = vmax.f32 %v227, 0.0
      %230 = vst [vmem:[%s208] sm:$0xff] %v228
      %231 = vst [vmem:[%s208 + $0x8] sm:$0xff] %v229
      %s232 = smul.u32 2, %s19
      %p233 = scmp.lt.s32.totalorder %s18, 1
      %s234 = scalar_select %p233, %s18, 1
      %p235 = scmp.lt.s32.totalorder %s232, 1
      %s236 = scalar_select %p235, %s232, 1
      %s237 = smul.addr %s234, 2
      %s238 = sadd.s32 %s236, %s237
      %s239 = smul.addr %s238, 8
      %s240 = scalar_lea.vmem %s3, %s239
      // Predicated region
      $region33: #{conv_block_forward.3} parent=31 // pred_check
        %p241 = pneg %p116
      $region34: #{conv_block_forward.3} parent=31 // pred_check_branch
        %243 = sbr.rel (%p241) target = $region36
      $region35: #{conv_block_forward.3} parent=31 // pred_region
        %s244 = smul.u32 2, %s19
      $region36: #{conv_block_forward.3} parent=31 // pred_fallthru
        _
    $region32: #{conv_block_forward.3} parent=5 // pred_fallthru
      _
    %p245 = scmp.le.s32.totalorder 2, %s9
    // Predicated region
    $region37: #{conv_block_forward.3} parent=5 // pred_check
      %p246 = pneg %p245
    $region38: #{conv_block_forward.3} parent=5 // pred_check_branch
      %248 = sbr.rel (%p246) target = $region40
    $region39: #{conv_block_forward.3} parent=5 // pred_region
      %s249 = ssub.s32 %s9, 2
      // Predicated region
      $region41: #{conv_block_forward.3} parent=39 // pred_check
        %p250 = pneg %p122
      $region42: #{conv_block_forward.3} parent=39 // pred_check_branch
        %252 = sbr.rel (%p250) target = $region44
      $region43: #{conv_block_forward.3} parent=39 // pred_region
        %s253 = smul.u32 2, %s21
        %p254 = scmp.lt.s32.totalorder %s20, 1
        %s255 = scalar_select %p254, %s20, 1
        %p256 = scmp.lt.s32.totalorder %s253, 1
        %s257 = scalar_select %p256, %s253, 1
        %s258 = smul.addr %s255, 2
        %s259 = sadd.s32 %s257, %s258
        %s260 = smul.addr %s259, 8
        %s261 = scalar_lea.vmem %s3, %s260
      $region44: #{conv_block_forward.3} parent=39 // pred_fallthru
        _
    $region40: #{conv_block_forward.3} parent=5 // pred_fallthru
      _
  $region6: #{conv_block_forward.3} parent=0 // loop_footer
    %s13 = sadd.s32 1, %s9
  $region7: #{conv_block_forward.3} parent=0 // loop_footer_branch
    %8 = sbr.rel target = $region3
  $region8: #{conv_block_forward.3} parent=0 // loop_exit
    _

// kernel: conv_block_forward.2
$region0: #{conv_block_forward.2}
  #allocation0 [shape = 'u32[]', space=smem, size = 0x4, offset = 0x4, fixed_abs, tag = 'smem constant byte address 0x4 - core index']
  #allocation1 [shape = 'u32[144,128]{1,0:T(1,128)}', space=vmem, size = 0x12000, scoped, tag = 'internal scratch']
  %s0 = inlined_call_operand.vmem [shape: f32[2,2,4,256], index: 0, kind: input, shape index: {}]
  %s1 = inlined_call_operand.vmem [shape: f32[8,36], index: 1, kind: input, shape index: {}]
  %s2 = inlined_call_operand.vmem [shape: f32[8,1], index: 2, kind: input, shape index: {}]
  %s3 = inlined_call_operand.vmem [shape: f32[2,8,256], index: 3, kind: output, shape index: {0}]
  %s4 = inlined_call_operand.vmem [shape: f32[2,8,1], index: 4, kind: output, shape index: {1}]
  %s5 = inlined_call_operand.vmem [shape: f32[2,8,1], index: 5, kind: output, shape index: {2}]
  %6 = xla_tuple %s3, %s4, %s5
  %s7 = sld [smem:[#allocation0]]
  $region65: #{conv_block_forward.2} parent=0
    _
  %s9 = ssub.s32 1, %s7
  %s10 = scalar_select 0, %s9, %s7
  loop: start=0, step=1, limit=6
  $region2: #{conv_block_forward.2} parent=0 // loop_pre_header
    _
  $region3: #{conv_block_forward.2} parent=0 // loop_header
    %s12 = sphi 0, %s16
    %p13 = scmp.ge.s32.totalorder %s12, 6
    %s19 = sphi 0, %s31
    %s20 = sphi 0, %s27
    %s21 = sphi 0, %s19
    %s22 = sphi 0, %s20
    %s23 = sphi 0, %s21
    %s24 = sphi 0, %s22
    %s36 = sphi 0, %s38
    %s39 = sphi 0, %s36
    %s40 = sphi 0, %s39
    %s56 = sphi 0, %s40
    %s60 = sphi 0, %s60
    %s62 = sphi 0, %s60
    %s63 = sphi 0, %s62
    %s77 = sphi 0, %s63
    %s81 = sphi 0, %s81
    %s83 = sphi 0, %s81
    %s84 = sphi 0, %s83
    %s98 = sphi 0, %s84
    %s106 = sphi 0, %s108
    %s109 = sphi 0, %s106
    %s110 = sphi 0, %s109
    %s126 = sphi 0, %s110
    %s132 = sphi 0, %s134
    %s135 = sphi 0, %s132
    %s136 = sphi 0, %s135
    %s152 = sphi 0, %s136
    %s158 = sphi 0, %s160
    %s161 = sphi 0, %s158
    %s162 = sphi 0, %s161
    %s178 = sphi 0, %s162
  $region4: #{conv_block_forward.2} parent=0 // loop_header_branch
    %15 = sbr.rel (%p13) target = $region8
  $region5: #{conv_block_forward.2} parent=0 // loop_body
    %s17 = ssub.s32 %s12, 1
    %s18 = ssub.s32 %s12, 2
    %s25 = sadd.s32 1, %s20
    %p26 = scmp.ge.s32.totalorder %s25, 2
    %s27 = scalar_select %p26, 0, %s25
    %s28 = sadd.s32 1, %s19
    %s29 = scalar_select %p26, %s28, %s19
    %p30 = scmp.ge.s32.totalorder %s29, 2
    %s31 = scalar_select %p30, 0, %s29
    %s32 = ssub.s32 %s19, %s31
    %s33 = ssub.s32 %s20, %s27
    %s34 = sor.u32 %s32, %s33
    %p35 = scmp.eq.s32.totalorder %s34, 0
    %s37 = sadd.s32 %s36, 1
    %s38 = scalar_select %p35, %s36, %s37
    %p41 = pneg %p35
    %p42 = scmp.eq.s32.totalorder %s12, 3
    %p43 = por %p41, %p42
    %p44 = scmp.ne.s32.totalorder %s36, %s39
    %p45 = scmp.eq.s32.totalorder %s12, 0
    %p46 = por %p44, %p45
    %p47 = scmp.ne.s32.totalorder %s36, %s39
    %p48 = scmp.eq.s32.totalorder %s17, 3
    %p49 = por %p47, %p48
    %p50 = scmp.ne.s32.totalorder %s39, %s40
    %p51 = scmp.eq.s32.totalorder %s17, 0
    %p52 = por %p50, %p51
    %p53 = scmp.ne.s32.totalorder %s39, %s40
    %p54 = scmp.eq.s32.totalorder %s18, 3
    %p55 = por %p53, %p54
    %p57 = scmp.ne.s32.totalorder %s40, %s56
    %p58 = scmp.eq.s32.totalorder %s18, 0
    %p59 = por %p57, %p58
    %s61 = sadd.s32 %s60, 1
    %p64 = scmp.eq.s32.totalorder %s12, 3
    %p65 = scmp.ne.s32.totalorder %s60, %s62
    %p66 = scmp.eq.s32.totalorder %s12, 0
    %p67 = por %p65, %p66
    %p68 = scmp.ne.s32.totalorder %s60, %s62
    %p69 = scmp.eq.s32.totalorder %s17, 3
    %p70 = por %p68, %p69
    %p71 = scmp.ne.s32.totalorder %s62, %s63
    %p72 = scmp.eq.s32.totalorder %s17, 0
    %p73 = por %p71, %p72
    %p74 = scmp.ne.s32.totalorder %s62, %s63
    %p75 = scmp.eq.s32.totalorder %s18, 3
    %p76 = por %p74, %p75
    %p78 = scmp.ne.s32.totalorder %s63, %s77
    %p79 = scmp.eq.s32.totalorder %s18, 0
    %p80 = por %p78, %p79
    %s82 = sadd.s32 %s81, 1
    %p85 = scmp.eq.s32.totalorder %s12, 3
    %p86 = scmp.ne.s32.totalorder %s81, %s83
    %p87 = scmp.eq.s32.totalorder %s12, 0
    %p88 = por %p86, %p87
    %p89 = scmp.ne.s32.totalorder %s81, %s83
    %p90 = scmp.eq.s32.totalorder %s17, 3
    %p91 = por %p89, %p90
    %p92 = scmp.ne.s32.totalorder %s83, %s84
    %p93 = scmp.eq.s32.totalorder %s17, 0
    %p94 = por %p92, %p93
    %p95 = scmp.ne.s32.totalorder %s83, %s84
    %p96 = scmp.eq.s32.totalorder %s18, 3
    %p97 = por %p95, %p96
    %p99 = scmp.ne.s32.totalorder %s84, %s98
    %p100 = scmp.eq.s32.totalorder %s18, 0
    %p101 = por %p99, %p100
    %s102 = ssub.s32 %s19, %s31
    %s103 = ssub.s32 %s20, %s27
    %s104 = sor.u32 %s102, %s103
    %p105 = scmp.eq.s32.totalorder %s104, 0
    %s107 = sadd.s32 %s106, 1
    %s108 = scalar_select %p105, %s106, %s107
    %p111 = pneg %p105
    %p112 = scmp.eq.s32.totalorder %s12, 3
    %p113 = por %p111, %p112
    %p114 = scmp.ne.s32.totalorder %s106, %s109
    %p115 = scmp.eq.s32.totalorder %s12, 0
    %p116 = por %p114, %p115
    %p117 = scmp.ne.s32.totalorder %s106, %s109
    %p118 = scmp.eq.s32.totalorder %s17, 3
    %p119 = por %p117, %p118
    %p120 = scmp.ne.s32.totalorder %s109, %s110
    %p121 = scmp.eq.s32.totalorder %s17, 0
    %p122 = por %p120, %p121
    %p123 = scmp.ne.s32.totalorder %s109, %s110
    %p124 = scmp.eq.s32.totalorder %s18, 3
    %p125 = por %p123, %p124
    %p127 = scmp.ne.s32.totalorder %s110, %s126
    %p128 = scmp.eq.s32.totalorder %s18, 0
    %p129 = por %p127, %p128
    %s130 = ssub.s32 %s19, %s31
    %p131 = scmp.eq.s32.totalorder %s130, 0
    %s133 = sadd.s32 %s132, 1
    %s134 = scalar_select %p131, %s132, %s133
    %p137 = pneg %p131
    %p138 = scmp.eq.s32.totalorder %s12, 3
    %p139 = por %p137, %p138
    %p140 = scmp.ne.s32.totalorder %s132, %s135
    %p141 = scmp.eq.s32.totalorder %s12, 0
    %p142 = por %p140, %p141
    %p143 = scmp.ne.s32.totalorder %s132, %s135
    %p144 = scmp.eq.s32.totalorder %s17, 3
    %p145 = por %p143, %p144
    %p146 = scmp.ne.s32.totalorder %s135, %s136
    %p147 = scmp.eq.s32.totalorder %s17, 0
    %p148 = por %p146, %p147
    %p149 = scmp.ne.s32.totalorder %s135, %s136
    %p150 = scmp.eq.s32.totalorder %s18, 3
    %p151 = por %p149, %p150
    %p153 = scmp.ne.s32.totalorder %s136, %s152
    %p154 = scmp.eq.s32.totalorder %s18, 0
    %p155 = por %p153, %p154
    %s156 = ssub.s32 %s19, %s31
    %p157 = scmp.eq.s32.totalorder %s156, 0
    %s159 = sadd.s32 %s158, 1
    %s160 = scalar_select %p157, %s158, %s159
    %p163 = pneg %p157
    %p164 = scmp.eq.s32.totalorder %s12, 3
    %p165 = por %p163, %p164
    %p166 = scmp.ne.s32.totalorder %s158, %s161
    %p167 = scmp.eq.s32.totalorder %s12, 0
    %p168 = por %p166, %p167
    %p169 = scmp.ne.s32.totalorder %s158, %s161
    %p170 = scmp.eq.s32.totalorder %s17, 3
    %p171 = por %p169, %p170
    %p172 = scmp.ne.s32.totalorder %s161, %s162
    %p173 = scmp.eq.s32.totalorder %s17, 0
    %p174 = por %p172, %p173
    %p175 = scmp.ne.s32.totalorder %s161, %s162
    %p176 = scmp.eq.s32.totalorder %s18, 3
    %p177 = por %p175, %p176
    %p179 = scmp.ne.s32.totalorder %s162, %s178
    %p180 = scmp.eq.s32.totalorder %s18, 0
    %p181 = por %p179, %p180
    %p182 = scmp.le.s32.totalorder 1, %s12
    %p183 = scmp.lt.s32.totalorder %s12, 5
    %p184 = pnand %p182, %p183
    %p185 = pneg %p184
    // Predicated region
    $region9: #{conv_block_forward.2} parent=5 // pred_check
      _
    $region10: #{conv_block_forward.2} parent=5 // pred_check_branch
      %187 = sbr.rel (%p184) target = $region12
    $region11: #{conv_block_forward.2} parent=5 // pred_region
      %s188 = ssub.s32 %s12, 1
      // Predicated region
      $region13: #{conv_block_forward.2} parent=11 // pred_check
        %p189 = pneg %p73
      $region14: #{conv_block_forward.2} parent=11 // pred_check_branch
        %191 = sbr.rel (%p189) target = $region16
      $region15: #{conv_block_forward.2} parent=11 // pred_region
        _
      $region16: #{conv_block_forward.2} parent=11 // pred_fallthru
        _
      // Predicated region
      $region17: #{conv_block_forward.2} parent=11 // pred_check
        %p192 = pneg %p94
      $region18: #{conv_block_forward.2} parent=11 // pred_check_branch
        %194 = sbr.rel (%p192) target = $region20
      $region19: #{conv_block_forward.2} parent=11 // pred_region
        _
      $region20: #{conv_block_forward.2} parent=11 // pred_fallthru
        _
    $region12: #{conv_block_forward.2} parent=5 // pred_fallthru
      _
    %p195 = scmp.lt.s32.totalorder %s12, 4
    // Predicated region
    $region21: #{conv_block_forward.2} parent=5 // pred_check
      %p196 = pneg %p195
    $region22: #{conv_block_forward.2} parent=5 // pred_check_branch
      %198 = sbr.rel (%p196) target = $region24
    $region23: #{conv_block_forward.2} parent=5 // pred_region
      // Predicated region
      $region25: #{conv_block_forward.2} parent=23 // pred_check
        %p199 = pneg %p46
      $region26: #{conv_block_forward.2} parent=23 // pred_check_branch
        %201 = sbr.rel (%p199) target = $region28
      $region27: #{conv_block_forward.2} parent=23 // pred_region
        %p202 = scmp.lt.s32.totalorder %s19, 1
        %s203 = scalar_select %p202, %s19, 1
        %p204 = scmp.lt.s32.totalorder %s20, 1
        %s205 = scalar_select %p204, %s20, 1
        %s206 = smul.addr %s205, 2
        %s207 = smul.addr %s203, 4
        %s208 = sadd.s32 %s206, %s207
        %s209 = smul.addr %s208, 4
        %s210 = scalar_lea.vmem %s0, %s209
      $region28: #{conv_block_forward.2} parent=23 // pred_fallthru
        _
    $region24: #{conv_block_forward.2} parent=5 // pred_fallthru
      _
    %p211 = scmp.le.s32.totalorder 1, %s12
    %p212 = scmp.lt.s32.totalorder %s12, 5
    %p213 = pnand %p211, %p212
    %p214 = pneg %p213
    // Predicated region
    $region29: #{conv_block_forward.2} parent=5 // pred_check
      _
    $region30: #{conv_block_forward.2} parent=5 // pred_check_branch
      %216 = sbr.rel (%p213) target = $region32
    $region31: #{conv_block_forward.2} parent=5 // pred_region
      %s217 = ssub.s32 %s12, 1
      %p218 = scmp.lt.s32.totalorder %s21, 1
      %s219 = scalar_select %p218, %s21, 1
      %p220 = scmp.lt.s32.totalorder %s22, 1
      %s221 = scalar_select %p220, %s22, 1
      %s222 = smul.addr %s221, 2
      %s223 = smul.addr %s219, 4
      %s224 = sadd.s32 %s222, %s223
      %s225 = smul.addr %s224, 4
      %s226 = scalar_lea.vmem %s0, %s225
      %p227 = pneg %p52
      %p228 = pneg %p49
      %p229 = pneg %p73
      %p230 = pneg %p70
      %p231 = pneg %p94
      %p232 = pneg %p91
      %p233 = pneg %p122
      %p234 = pneg %p119
      %p235 = scmp.lt.s32.totalorder %s21, 1
      %s236 = scalar_select %p235, %s21, 1
      %p237 = scmp.lt.s32.totalorder %s22, 1
      %s238 = scalar_select %p237, %s22, 1
      %s239 = smul.addr %s236, 2
      %s240 = sadd.s32 %s238, %s239
      %s241 = smul.addr %s240, 8
      %s242 = scalar_lea.vmem %s3, %s241
      %p243 = pneg %p148
      %p244 = pneg %p145
      %p245 = scmp.lt.s32.totalorder %s21, 1
      %s246 = scalar_select %p245, %s21, 1
      %s247 = smul.addr %s246, 8
      %s248 = scalar_lea.vmem %s4, %s247
      %p249 = pneg %p174
      %p250 = pneg %p171
      %p251 = scmp.lt.s32.totalorder %s21, 1
      %s252 = scalar_select %p251, %s21, 1
      %s253 = smul.addr %s252, 8
      %s254 = scalar_lea.vmem %s5, %s253
      %p255 = scmp.lt.s32.totalorder %s21, 1
      %s256 = scalar_select %p255, %s21, 1
      %p257 = scmp.lt.s32.totalorder %s22, 1
      %s258 = scalar_select %p257, %s22, 1
      %s259 = smul.addr %s258, 2
      %s260 = smul.addr %s256, 4
      %s261 = sadd.s32 %s259, %s260
      %s262 = smul.addr %s261, 4
      %s263 = scalar_lea.vmem %s0, %s262
      %p264 = scmp.lt.s32.totalorder %s21, 1
      %s265 = scalar_select %p264, %s21, 1
      %p266 = scmp.lt.s32.totalorder %s22, 1
      %s267 = scalar_select %p266, %s22, 1
      %s268 = smul.addr %s265, 2
      %s269 = sadd.s32 %s267, %s268
      %s270 = smul.addr %s269, 8
      %s271 = scalar_lea.vmem %s3, %s270
      %p272 = scmp.lt.s32.totalorder %s21, 1
      %s273 = scalar_select %p272, %s21, 1
      %s274 = smul.addr %s273, 8
      %s275 = scalar_lea.vmem %s4, %s274
      %p276 = scmp.lt.s32.totalorder %s21, 1
      %s277 = scalar_select %p276, %s21, 1
      %s278 = smul.addr %s277, 8
      %s279 = scalar_lea.vmem %s5, %s278
      %v280 = vld [vmem:[%s263] sm:$0xff]
      %v281 = vlaneseq
      %v282 = vand.u32 %v281, 127
      %vm283 = vcmp.lt.s32.totalorder %v282, 0
      %v284 = vsub.s32 0, %v282
      %v285 = vsel %vm283, %v284, %v282
      %v286 = vshrl.u32 %v285, 4
      %v287 = vand.u32 %v285, 15
      %v288 = vsub.s32 0, %v287
      %v289 = vsel %vm283, %v288, %v287
      %vm290 = vcmp.ne.s32.totalorder %v289, 0
      %vm291 = vcmp.lt.s32.totalorder %v289, 0
      %vm292 = vmand %vm291, %vm290
      %v293 = vadd.s32 %v289, 16
      %v294 = vsel %vm292, %v293, %v289
      %vm295 = vcmp.ge.s32.totalorder %v294, 1
      %vm296 = vcmp.lt.s32.totalorder %v294, 17
      %vm297 = vmand %vm295, %vm296
      %vm298 = vcmp.ge.s32.totalorder %v294, 4294967295
      %vm299 = vcmp.lt.s32.totalorder %v294, 15
      %vm300 = vmand %vm298, %vm299
      %v301 = vsel %vm297, 1, 0
      %vm302 = vcmp.eq.s32.totalorder %v301, 1
      %v303 = vsel %vm302, %v280, 0.0
      %v304 = vsel %vm300, 1, 0
      %vm305 = vcmp.eq.s32.totalorder %v304, 1
      %v307 = vcombine.high %v280, %v280
      %308 = vrot.lane.b32.xlu0 %v280, 126
      %v309 = vpop.permute.xlu0 %308
      %310 = vrot.lane.b32.xlu0 %v307, 126
      %v311 = vpop.permute.xlu0 %310
      %vm312 = vcmask 1031168
      %v313 = vsel %vm312, %v309, %v311
      %v315 = vsel %vm305, %v313, 0.0
      %316 = vrot.lane.b32.xlu0 %v280, 112
      %v317 = vpop.permute.xlu0 %316
      %318 = vrot.lane.b32.xlu0 %v307, 112
      %v319 = vpop.permute.xlu0 %318
      %vm320 = vcmask 916480
      %v321 = vsel %vm320, %v317, %v319
      %v323 = vsel %vm302, %v321, 0.0
      %324 = vrot.lane.b32.xlu0 %v280, 110
      %v325 = vpop.permute.xlu0 %324
      %326 = vrot.lane.b32.xlu0 %v307, 110
      %v327 = vpop.permute.xlu0 %326
      %vm328 = vcmask 900096
      %v329 = vsel %vm328, %v325, %v327
      %v331 = vsel %vm305, %v329, 0.0
      %332 = vrot.lane.b32.xlu0 %v280, 96
      %v333 = vpop.permute.xlu0 %332
      %334 = vrot.lane.b32.xlu0 %v307, 96
      %v335 = vpop.permute.xlu0 %334
      %vm336 = vcmask 785408
      %v337 = vsel %vm336, %v333, %v335
      %v339 = vsel %vm302, %v337, 0.0
      %340 = vrot.lane.b32.xlu0 %v280, 94
      %v341 = vpop.permute.xlu0 %340
      %342 = vrot.lane.b32.xlu0 %v307, 94
      %v343 = vpop.permute.xlu0 %342
      %vm344 = vcmask 769024
      %v345 = vsel %vm344, %v341, %v343
      %v347 = vsel %vm305, %v345, 0.0
      %v348 = vcombine.low %v280, %v280
      %349 = vrot.lane.b32.xlu0 %v348, 127
      %v350 = vpop.permute.xlu0 %349
      %351 = vrot.lane.b32.xlu0 %v280, 127
      %v352 = vpop.permute.xlu0 %351
      %vm353 = vcmask 1039360
      %v354 = vsel %vm353, %v350, %v352
      %v357 = vrot.slane %v323, 4
      %359 = vrot.lane.b32.xlu0 %v280, 111
      %v360 = vpop.permute.xlu0 %359
      %361 = vrot.lane.b32.xlu0 %v307, 111
      %v362 = vpop.permute.xlu0 %361
      %vm363 = vcmask 908288
      %v364 = vsel %vm363, %v360, %v362
      %v367 = vrot.slane %v331, 4
      %369 = vrot.lane.b32.xlu0 %v348, 95
      %v370 = vpop.permute.xlu0 %369
      %371 = vrot.lane.b32.xlu0 %v280, 95
      %v372 = vpop.permute.xlu0 %371
      %vm373 = vcmask 777216
      %v374 = vsel %vm373, %v370, %v372
      %vm376 = vcmask 1043456
      %v377 = vsel %vm376, %v303, %v354
      %v378 = vsel %vm376, %v315, %v357
      %v379 = vsel %vm376, %v364, %v367
      %v380 = vsel %vm376, %v339, %v374
      %v381 = vld [vmem:[%s1] sm:$0xff]
      %v382 = vld [vmem:[%s2] sm:$0xff]
      %384 = vset.pattern.permute.xlu0 0
      %385 = vperm.xlu0 %384, %v382
      %v386 = vpop.permute.xlu0 %385
      %vm388 = vcmask 293888
      %v390 = vsel %vm388, %v381, 0
      %v393 = vsel %vm376, %v347, 0
      %395 = vmatprep.subr.mxu0 0.0
      %396 = vmatpush1.msra.mxu0 %v377
      %397 = vmatprep.subr.mxu0 0.0
      %398 = vmatpush1.msra.mxu0 %v378
      %399 = vmatprep.subr.mxu0 0.0
      %400 = vmatpush1.msra.mxu0 %v379
      %401 = vmatprep.subr.mxu0 0.0
      %402 = vmatpush1.msra.mxu0 %v380
      %403 = vmatprep.subr.mxu0 0.0
      %404 = vmatpush1.msra.mxu0 %v393
      %405 = vmatprep.subr.mxu0 0.0
      %406 = vmatpush1.msra.mxu0 0.0
      %407 = vmatprep.subr.mxu0 0.0
      %408 = vmatpush1.msra.mxu0 0.0
      %409 = vmatprep.subr.mxu0 0.0
      %410 = vmatpush1.msra.mxu0 0.0
      %411 = vmatprep.subr.mxu0 0.0
      %412 = vmatpush1.msra.mxu0 0.0
      %413 = vmatprep.subr.mxu0 0.0
      %414 = vmatpush1.msra.mxu0 0.0
      %415 = vmatprep.subr.mxu0 0.0
      %416 = vmatpush1.msra.mxu0 0.0
      %417 = vmatprep.subr.mxu0 0.0
      %418 = vmatpush1.msra.mxu0 0.0
      %419 = vmatprep.subr.mxu0 0.0
      %420 = vmatpush1.msra.mxu0 0.0
      %421 = vmatprep.subr.mxu0 0.0
      %422 = vmatpush1.msra.mxu0 0.0
      %423 = vmatprep.subr.mxu0 0.0
      %424 = vmatpush1.msra.mxu0 0.0
      %425 = vmatprep.subr.mxu0 0.0
      %426 = vmatpush1.msra.mxu0 0.0
      %427 = vmatprep.subr.mxu0 0.0
      %428 = vmatpush1.msra.mxu0 0.0
      %429 = vmatprep.subr.mxu0 0.0
      %430 = vmatpush1.msra.mxu0 0.0
      %431 = vmatprep.subr.mxu0 0.0
      %432 = vmatpush1.msra.mxu0 0.0
      %433 = vmatprep.subr.mxu0 0.0
      %434 = vmatpush1.msra.mxu0 0.0
      %435 = vmatprep.subr.mxu0 0.0
      %436 = vmatpush1.msra.mxu0 0.0
      %437 = vmatprep.subr.mxu0 0.0
      %438 = vmatpush1.msra.mxu0 0.0
      %439 = vmatprep.subr.mxu0 0.0
      %440 = vmatpush1.msra.mxu0 0.0
      %441 = vmatprep.subr.mxu0 0.0
      %442 = vmatpush1.msra.mxu0 0.0
      %443 = vmatprep.subr.mxu0 0.0
      %444 = vmatpush1.msra.mxu0 0.0
      %445 = vmatprep.subr.mxu0 0.0
      %446 = vmatpush1.msra.mxu0 0.0
      %447 = vmatprep.subr.mxu0 0.0
      %448 = vmatpush1.msra.mxu0 0.0
      %449 = vmatprep.subr.mxu0 0.0
      %450 = vmatpush1.msra.mxu0 0.0
      %451 = vmatprep.subr.mxu0 0.0
      %452 = vmatpush1.msra.mxu0 0.0
      %453 = vmatprep.subr.mxu0 0.0
      %454 = vmatpush1.msra.mxu0 0.0
      %455 = vmatprep.subr.mxu0 0.0
      %456 = vmatpush1.msra.mxu0 0.0
      %457 = vmatprep.subr.mxu0 0.0
      %458 = vmatpush1.msra.mxu0 0.0
      %459 = vmatprep.mubr.f32.mxu0 0.0
      %460 = vmatmul.mubr.f32.gmra.mrb[0].mxu0 %v390
      %v461 = vpop.f32.mrb[0].mxu0
      %v462 = vadd.f32 %v386, %v461
      %v463 = vpop.f32.mrb[0].mxu0
      %464 = vdwg.mxu0
      %465 = vst [vmem:[%s271] sm:$0xff] %v462
      %p466 = scmp.eq.s32.totalorder %s22, 0
      // Predicated region
      $region33: #{conv_block_forward.2} parent=31 // pred_check
        %p467 = pneg %p466
      $region34: #{conv_block_forward.2} parent=31 // pred_check_branch
        %469 = sbr.rel (%p467) target = $region36
      $region35: #{conv_block_forward.2} parent=31 // pred_region
        %vm470 = vcmask 7168
        %471 = vst.msk [vmem:[%s275] sm:$0xff] %vm470, 0.0
        %472 = vst.msk [vmem:[%s279] sm:$0xff] %vm470, 0.0
      $region36: #{conv_block_forward.2} parent=31 // pred_fallthru
        _
      %v473 = vld [vmem:[%s275] sm:$0xff]
      %474 = vadd.xlane.f32.xlu0 %v462
      %v475 = vpop.xlane.xlu0 %474
      %v476 = vadd.f32 %v473, %v475
      %vm477 = vcmask 7168
      %478 = vst.msk [vmem:[%s275] sm:$0xff] %vm477, %v476
      %v479 = vld [vmem:[%s279] sm:$0xff]
      %v480 = vmul.f32 %v462, %v462
      %481 = vadd.xlane.f32.xlu0 %v480
      %v482 = vpop.xlane.xlu0 %481
      %v483 = vadd.f32 %v479, %v482
      %484 = vst.msk [vmem:[%s279] sm:$0xff] %vm477, %v483
      %p485 = scmp.lt.s32.totalorder %s21, 1
      %s486 = scalar_select %p485, %s21, 1
      %p487 = scmp.lt.s32.totalorder %s22, 1
      %s488 = scalar_select %p487, %s22, 1
      %s489 = smul.addr %s486, 2
      %s490 = sadd.s32 %s488, %s489
      %s491 = smul.addr %s490, 8
      %s492 = scalar_lea.vmem %s3, %s491
      %p493 = scmp.lt.s32.totalorder %s21, 1
      %s494 = scalar_select %p493, %s21, 1
      %s495 = smul.addr %s494, 8
      %s496 = scalar_lea.vmem %s4, %s495
      %p497 = scmp.lt.s32.totalorder %s21, 1
      %s498 = scalar_select %p497, %s21, 1
      %s499 = smul.addr %s498, 8
      %s500 = scalar_lea.vmem %s5, %s499
      // Predicated region
      $region37: #{conv_block_forward.2} parent=31 // pred_check
        %p501 = pneg %p119
      $region38: #{conv_block_forward.2} parent=31 // pred_check_branch
        %503 = sbr.rel (%p501) target = $region40
      $region39: #{conv_block_forward.2} parent=31 // pred_region
        _
      $region40: #{conv_block_forward.2} parent=31 // pred_fallthru
        _
      // Predicated region
      $region41: #{conv_block_forward.2} parent=31 // pred_check
        %p504 = pneg %p145
      $region42: #{conv_block_forward.2} parent=31 // pred_check_branch
        %506 = sbr.rel (%p504) target = $region44
      $region43: #{conv_block_forward.2} parent=31 // pred_region
        _
      $region44: #{conv_block_forward.2} parent=31 // pred_fallthru
        _
      // Predicated region
      $region45: #{conv_block_forward.2} parent=31 // pred_check
        %p507 = pneg %p171
      $region46: #{conv_block_forward.2} parent=31 // pred_check_branch
        %509 = sbr.rel (%p507) target = $region48
      $region47: #{conv_block_forward.2} parent=31 // pred_region
        _
      $region48: #{conv_block_forward.2} parent=31 // pred_fallthru
        _
    $region32: #{conv_block_forward.2} parent=5 // pred_fallthru
      _
    %p510 = scmp.le.s32.totalorder 2, %s12
    // Predicated region
    $region49: #{conv_block_forward.2} parent=5 // pred_check
      %p511 = pneg %p510
    $region50: #{conv_block_forward.2} parent=5 // pred_check_branch
      %513 = sbr.rel (%p511) target = $region52
    $region51: #{conv_block_forward.2} parent=5 // pred_region
      %s514 = ssub.s32 %s12, 2
      // Predicated region
      $region53: #{conv_block_forward.2} parent=51 // pred_check
        %p515 = pneg %p125
      $region54: #{conv_block_forward.2} parent=51 // pred_check_branch
        %517 = sbr.rel (%p515) target = $region56
      $region55: #{conv_block_forward.2} parent=51 // pred_region
        %p518 = scmp.lt.s32.totalorder %s23, 1
        %s519 = scalar_select %p518, %s23, 1
        %p520 = scmp.lt.s32.totalorder %s24, 1
        %s521 = scalar_select %p520, %s24, 1
        %s522 = smul.addr %s519, 2
        %s523 = sadd.s32 %s521, %s522
        %s524 = smul.addr %s523, 8
        %s525 = scalar_lea.vmem %s3, %s524
      $region56: #{conv_block_forward.2} parent=51 // pred_fallthru
        _
      // Predicated region
      $region57: #{conv_block_forward.2} parent=51 // pred_check
        %p526 = pneg %p151
      $region58: #{conv_block_forward.2} parent=51 // pred_check_branch
        %528 = sbr.rel (%p526) target = $region60
      $region59: #{conv_block_forward.2} parent=51 // pred_region
        %p529 = scmp.lt.s32.totalorder %s23, 1
        %s530 = scalar_select %p529, %s23, 1
        %s531 = smul.addr %s530, 8
        %s532 = scalar_lea.vmem %s4, %s531
      $region60: #{conv_block_forward.2} parent=51 // pred_fallthru
        _
      // Predicated region
      $region61: #{conv_block_forward.2} parent=51 // pred_check
        %p533 = pneg %p177
      $region62: #{conv_block_forward.2} parent=51 // pred_check_branch
        %535 = sbr.rel (%p533) target = $region64
      $region63: #{conv_block_forward.2} parent=51 // pred_region
        %p536 = scmp.lt.s32.totalorder %s23, 1
        %s537 = scalar_select %p536, %s23, 1
        %s538 = smul.addr %s537, 8
        %s539 = scalar_lea.vmem %s5, %s538
      $region64: #{conv_block_forward.2} parent=51 // pred_fallthru
        _
    $region52: #{conv_block_forward.2} parent=5 // pred_fallthru
      _
  $region6: #{conv_block_forward.2} parent=0 // loop_footer
    %s16 = sadd.s32 1, %s12
  $region7: #{conv_block_forward.2} parent=0 // loop_footer_branch
    %11 = sbr.rel target = $region3
  $region8: #{conv_block_forward.2} parent=0 // loop_exit
    _

</llo_original>
